<compile_context>
chip_gen: v6e
topology: v6e:2x2x1
jax: 0.10.0
libtpu: 0.0.40
codegen_flags: <defaults>
</compile_context>

<pallas_src>
import functools

import jax
import jax.numpy as jnp
from jax.experimental import pallas as pl
from jax.experimental.pallas import tpu as pltpu


def _dice_partial_kernel(logits_ref, targets_ref, out_ref, acc_i, acc_pt, *,
                         tile_n, ch, nchunks, inner_tiles, n_valid, ragged):
    """Streaming per-(batch, split-slice) reduction.

    Emits, once per (batch, split) pair, a lane-padded (1, 1, 128) partial:
      lane 0: sum(sigmoid(x) * t)          over this slice's lane tiles
      lane 1: sum(sigmoid(x)) + sum(t)     over this slice's lane tiles
    """
    si = pl.program_id(1)
    k = pl.program_id(2)
    last_inner = k == pl.num_programs(2) - 1                 # write partial
    last_global = jnp.logical_and(last_inner,
                                  si == pl.num_programs(1) - 1)  # ragged tile
    tile_base = (si * inner_tiles + k) * tile_n
    r = logits_ref.shape[1]

    @pl.when(k == 0)
    def _():
        acc_i[...] = jnp.zeros_like(acc_i)
        acc_pt[...] = jnp.zeros_like(acc_pt)

    def chunk_update(carry, off, masked):
        ai, apt = carry
        # Aligned lane-chunk loads; promote to f32 in-kernel, sigmoid on EUP.
        x = logits_ref[:, :, pl.ds(off, ch)].astype(jnp.float32)
        t = targets_ref[:, :, pl.ds(off, ch)].astype(jnp.float32)
        p = jax.nn.sigmoid(x)
        if masked:
            lane = jax.lax.broadcasted_iota(jnp.int32, p.shape, 2)
            valid = (tile_base + off + lane) < n_valid
            # Mask BEFORE multiply/accumulate so padded-edge garbage never
            # reaches the sums.
            p = jnp.where(valid, p, 0.0)
            t = jnp.where(valid, t, 0.0)
        return ai + p * t, apt + (p + t)

    def accumulate(masked):
        # Chunk-wide accumulators live in vregs for the whole tile; the VMEM
        # scratch is touched once per grid step (not once per vreg pair).
        zero = jnp.zeros((1, r, ch), jnp.float32)
        carry = (zero, zero)
        if nchunks <= 4:
            for c in range(nchunks):                      # static, aligned
                carry = chunk_update(carry, c * ch, masked)
        else:
            def body(c, carry):
                off = pl.multiple_of(c * ch, ch)
                return chunk_update(carry, off, masked)
            carry = jax.lax.fori_loop(0, nchunks, body, carry,
                                      unroll=min(nchunks, 8))
        ai, apt = carry
        acc_i[...] += ai
        acc_pt[...] += apt

    if ragged:
        # Only the globally-last lane tile can be partial: keep the mask out
        # of the steady-state loop.
        @pl.when(last_global)
        def _():
            accumulate(True)

        @pl.when(jnp.logical_not(last_global))
        def _():
            accumulate(False)
    else:
        accumulate(False)

    @pl.when(last_inner)
    def _():
        inter = jnp.sum(acc_i[...])     # rare cross-lane reduce (once / slice)
        ptsum = jnp.sum(acc_pt[...])
        lane = jax.lax.broadcasted_iota(jnp.int32, out_ref.shape, 2)
        out_ref[...] = jnp.where(lane == 0, inter,
                                 jnp.where(lane == 1, ptsum, 0.0))


def _vmem_capacity_bytes():
    try:
        info = pltpu.get_tpu_info()
        cap = int(getattr(info, "vmem_capacity_bytes", 0))
        if cap > 0:
            return cap
    except Exception:
        pass
    return 64 * 1024 * 1024   # conservative fallback (v7x per-TC VMEM)


def _pick_tile_n(n_r, r, in_bytes_per_elem, budget):
    """Lane-tile size: as big as the VMEM input-buffer budget allows, a
    multiple of 128, capped at the (rounded-up) row length."""
    # Resident bytes per lane column of one grid step: double-buffered logits
    # + targets tiles in their native dtypes (accumulators are chunk-wide now).
    per_col = 2 * r * in_bytes_per_elem
    tile = (budget // per_col) // 128 * 128
    tile = max(128, min(int(tile), 256 * 1024))
    full = pl.cdiv(n_r, 128) * 128
    return int(min(tile, full))


def dice_loss(logits, targets, smooth=1.0, *, max_tile_n=None):
    """Pallas equivalent of DiceLoss.forward. Returns a scalar float32.

    Inputs may be any float dtype (bf16 recommended for bandwidth if it already
    exists upstream); promotion to f32 happens inside the kernel.
    """
    assert logits.shape == targets.shape
    b = logits.shape[0]
    logits2d = logits.reshape(b, -1)
    targets2d = targets.reshape(b, -1)
    n = logits2d.shape[1]

    # Sublane packing: (B, N) -> (B, R, N // R), a free row-major reshape that
    # fills all 8 vreg sublanes even when B is small.
    r = 8 if (n % 8 == 0) else 1
    n_r = n // r
    logits3d = logits2d.reshape(b, r, n_r)
    targets3d = targets2d.reshape(b, r, n_r)

    # Generation-aware VMEM budgets (128 MiB v5e/v6e vs 64 MiB v7x per core).
    vmem_cap = _vmem_capacity_bytes()
    vmem_limit = max(32 * 1024 * 1024,
                     min((vmem_cap * 3) // 4, vmem_cap - 24 * 1024 * 1024))
    input_budget = vmem_limit // 2

    in_bytes = logits.dtype.itemsize + targets.dtype.itemsize
    tile_n = _pick_tile_n(n_r, r, in_bytes, input_budget)
    if max_tile_n is not None:
        tile_n = max(128, min(tile_n, int(max_tile_n) // 128 * 128))

    # In-kernel chunk width (accumulators stay in vregs at this width).
    if tile_n >= 512:
        ch = 512
        tile_n = (tile_n // ch) * ch
    else:
        ch = tile_n
    nchunks = tile_n // ch

    num_tiles = pl.cdiv(n_r, tile_n)
    ragged = (n_r % tile_n) != 0

    # Lane-axis core-parallel split: with parallelism only over the batch axis,
    # a batch of 1 (or odd) leaves one v7x TensorCore idle.  split=2 only when
    # it divides the tile count exactly; no effect on single-TC v5e/v6e.
    split = 1
    if (b == 1 or b % 2 == 1) and num_tiles >= 2 and num_tiles % 2 == 0:
        split = 2
    inner_tiles = num_tiles // split

    kernel = functools.partial(
        _dice_partial_kernel, tile_n=tile_n, ch=ch, nchunks=nchunks,
        inner_tiles=inner_tiles, n_valid=n_r, ragged=ragged)

    in_spec = pl.BlockSpec((1, r, tile_n),
                           lambda bi, si, k: (bi, 0, si * inner_tiles + k))
    out_spec = pl.BlockSpec((1, 1, 128),
                            lambda bi, si, k: (bi * split + si, 0, 0))

    parts = pl.pallas_call(
        kernel,
        out_shape=jax.ShapeDtypeStruct((b * split, 1, 128), jnp.float32),
        grid_spec=pltpu.PrefetchScalarGridSpec(
            num_scalar_prefetch=0,
            grid=(b, split, inner_tiles),
            in_specs=[in_spec, in_spec],
            out_specs=out_spec,
            scratch_shapes=[
                pltpu.VMEM((1, r, ch), jnp.float32),   # acc sum(p*t)
                pltpu.VMEM((1, r, ch), jnp.float32),   # acc sum(p)+sum(t)
            ],
        ),
        compiler_params=pltpu.CompilerParams(
            dimension_semantics=("parallel", "parallel", "arbitrary"),
            vmem_limit_bytes=int(vmem_limit),
        ),
    )(logits3d, targets3d)

    # Tiny epilogue in plain JAX: combine split partials, dice per batch row,
    # then 1 - mean(dice).
    parts = parts[:, 0, :].reshape(b, split, 128)
    inter = jnp.sum(parts[..., 0], axis=1)
    ptsum = jnp.sum(parts[..., 1], axis=1)
    dice = (2.0 * inter + smooth) / (ptsum + smooth)
    return (1.0 - jnp.mean(dice)).astype(jnp.float32)


def dice_loss_reference(logits, targets, smooth=1.0):
    probs = jax.nn.sigmoid(logits.astype(jnp.float32))
    b = targets.shape[0]
    probs = probs.reshape(b, -1)
    t = targets.astype(jnp.float32).reshape(b, -1)
    inter = jnp.sum(probs * t, axis=1)
    dice = (2.0 * inter + smooth) / (jnp.sum(probs, axis=1)
                                     + jnp.sum(t, axis=1) + smooth)
    return 1.0 - jnp.mean(dice)


if __name__ == "__main__":
    key = jax.random.PRNGKey(0)
    k1, k2, k3, k4, k5, k6, k7, k8 = jax.random.split(key, 8)

    # Case 1: segmentation-style shapes (batch=2, channels=4, spatial=16x16),
    # N = 1024 -> sublane-packed (2, 8, 128), single tile, no mask.
    logits = jax.random.normal(k1, (2, 4, 16, 16), dtype=jnp.float32)
    targets = (jax.random.uniform(k2, (2, 4, 16, 16)) > 0.5).astype(jnp.float32)
    loss = jax.block_until_ready(dice_loss(logits, targets, smooth=1.0))
    ref = jax.block_until_ready(dice_loss_reference(logits, targets, smooth=1.0))
    assert jnp.allclose(loss, ref, atol=1e-5, rtol=1e-5), (loss, ref)

    # Case 2: ragged row (N = 864 -> n_r = 108) with bf16 targets — exercises
    # the gated in-kernel mask and mixed input dtypes.
    logits2 = jax.random.normal(k3, (2, 3, 16, 18), dtype=jnp.float32)
    targets2 = (jax.random.uniform(k4, (2, 3, 16, 18)) > 0.5).astype(jnp.bfloat16)
    loss2 = jax.block_until_ready(dice_loss(logits2, targets2, smooth=1.0))
    ref2 = jax.block_until_ready(
        dice_loss_reference(logits2, targets2.astype(jnp.float32), smooth=1.0))
    assert jnp.allclose(loss2, ref2, atol=1e-5, rtol=1e-5), (loss2, ref2)

    # Case 3: forced small tile (max_tile_n=1024) -> multi-tile grid, 2-chunk
    # in-kernel loop, ragged last tile with a fully-invalid chunk.
    logits3 = jax.random.normal(k5, (2, 4, 32, 96), dtype=jnp.float32)
    targets3 = (jax.random.uniform(k6, (2, 4, 32, 96)) > 0.5).astype(jnp.float32)
    loss3 = jax.block_until_ready(dice_loss(logits3, targets3, smooth=1.0,
                                            max_tile_n=1024))
    ref3 = jax.block_until_ready(dice_loss_reference(logits3, targets3, smooth=1.0))
    assert jnp.allclose(loss3, ref3, atol=1e-5, rtol=1e-5), (loss3, ref3)

    # Case 4: batch=1 with forced tiny tiles -> exercises the lane-axis
    # core-parallel split (split=2) and the split-summing epilogue.
    logits4 = jax.random.normal(k7, (1, 4, 16, 32), dtype=jnp.float32)
    targets4 = (jax.random.uniform(k8, (1, 4, 16, 32)) > 0.5).astype(jnp.float32)
    loss4 = jax.block_until_ready(dice_loss(logits4, targets4, smooth=1.0,
                                            max_tile_n=128))
    ref4 = jax.block_until_ready(dice_loss_reference(logits4, targets4, smooth=1.0))
    assert jnp.allclose(loss4, ref4, atol=1e-5, rtol=1e-5), (loss4, ref4)

    print("KERNEL_OK")
</pallas_src>

<mosaic_0001>
module attributes {stable_mosaic.version = 11 : i64} {
  func.func @_dice_partial_kernel(%arg0: i32, %arg1: i32, %arg2: i32, %arg3: memref<1x8x128xf32, #tpu.memory_space<vmem>>, %arg4: memref<1x8x128xf32, #tpu.memory_space<vmem>>, %arg5: memref<1x1x128xf32, #tpu.memory_space<vmem>>, %arg6: memref<1x8x128xf32, #tpu.memory_space<vmem>>, %arg7: memref<1x8x128xf32, #tpu.memory_space<vmem>>) attributes {dimension_semantics = [#tpu.dimension_semantics<parallel>, #tpu.dimension_semantics<parallel>, #tpu.dimension_semantics<arbitrary>], iteration_bounds = array<i64: 2, 1, 1>, scalar_prefetch = 0 : i64, scratch_operands = 2 : i64, tpu.core_type = #tpu.core_type<tc>, window_params = [{transform_indices = @transform_0, window_bounds = array<i64: 1, 8, 128>}, {transform_indices = @transform_1, window_bounds = array<i64: 1, 8, 128>}, {transform_indices = @transform_2, window_bounds = array<i64: 1, 1, 128>}]} {
    %c0_i32 = arith.constant 0 : i32
    %0 = arith.cmpi eq, %arg2, %c0_i32 : i32
    %c0_i32_0 = arith.constant 0 : i32
    %1 = arith.cmpi eq, %arg2, %c0_i32_0 : i32
    %2 = arith.extui %1 : i1 to i32
    %c0_i32_1 = arith.constant 0 : i32
    %3 = arith.cmpi ne, %2, %c0_i32_1 : i32
    scf.if %3 {
      %cst_21 = arith.constant 0.000000e+00 : f32
      %24 = vector.broadcast %cst_21 : f32 to vector<1x8x128xf32>
      %c0_22 = arith.constant 0 : index
      %c0_23 = arith.constant 0 : index
      %c0_24 = arith.constant 0 : index
      %25 = vector.load %arg6[%c0_22, %c0_23, %c0_24] : memref<1x8x128xf32, #tpu.memory_space<vmem>>, vector<1x8x128xf32>
      tpu.vector_store %arg6[%c0_22, %c0_23, %c0_24], %24 {strides = array<i32>} : memref<1x8x128xf32, #tpu.memory_space<vmem>>, vector<1x8x128xf32>,
      %cst_25 = arith.constant 0.000000e+00 : f32
      %26 = vector.broadcast %cst_25 : f32 to vector<1x8x128xf32>
      %c0_26 = arith.constant 0 : index
      %c0_27 = arith.constant 0 : index
      %c0_28 = arith.constant 0 : index
      %27 = vector.load %arg7[%c0_26, %c0_27, %c0_28] : memref<1x8x128xf32, #tpu.memory_space<vmem>>, vector<1x8x128xf32>
      tpu.vector_store %arg7[%c0_26, %c0_27, %c0_28], %26 {strides = array<i32>} : memref<1x8x128xf32, #tpu.memory_space<vmem>>, vector<1x8x128xf32>,
    } else {
    }
    %cst = arith.constant 0.000000e+00 : f32
    %4 = vector.broadcast %cst : f32 to vector<1x8x128xf32>
    %c0 = arith.constant 0 : index
    %c0_2 = arith.constant 0 : index
    %c0_3 = arith.constant 0 : index
    %5 = vector.load %arg3[%c0, %c0_2, %c0_3] : memref<1x8x128xf32, #tpu.memory_space<vmem>>, vector<1x8x128xf32>
    %c0_4 = arith.constant 0 : index
    %c0_5 = arith.constant 0 : index
    %c0_6 = arith.constant 0 : index
    %6 = vector.load %arg4[%c0_4, %c0_5, %c0_6] : memref<1x8x128xf32, #tpu.memory_space<vmem>>, vector<1x8x128xf32>
    %7 = arith.negf %5 : vector<1x8x128xf32>
    %8 = math.exp %7 : vector<1x8x128xf32>
    %cst_7 = arith.constant 1.000000e+00 : f32
    %9 = vector.broadcast %cst_7 : f32 to vector<1x8x128xf32>
    %10 = arith.addf %9, %8 : vector<1x8x128xf32>
    %11 = arith.divf %9, %10 : vector<1x8x128xf32>
    %12 = arith.mulf %11, %6 : vector<1x8x128xf32>
    %13 = arith.addf %4, %12 : vector<1x8x128xf32>
    %14 = arith.addf %11, %6 : vector<1x8x128xf32>
    %15 = arith.addf %4, %14 : vector<1x8x128xf32>
    %c0_8 = arith.constant 0 : index
    %c0_9 = arith.constant 0 : index
    %c0_10 = arith.constant 0 : index
    %16 = vector.load %arg6[%c0_8, %c0_9, %c0_10] : memref<1x8x128xf32, #tpu.memory_space<vmem>>, vector<1x8x128xf32>
    %17 = arith.addf %16, %13 : vector<1x8x128xf32>
    %c0_11 = arith.constant 0 : index
    %c0_12 = arith.constant 0 : index
    %c0_13 = arith.constant 0 : index
    %18 = vector.load %arg6[%c0_11, %c0_12, %c0_13] : memref<1x8x128xf32, #tpu.memory_space<vmem>>, vector<1x8x128xf32>
    tpu.vector_store %arg6[%c0_11, %c0_12, %c0_13], %17 {strides = array<i32>} : memref<1x8x128xf32, #tpu.memory_space<vmem>>, vector<1x8x128xf32>,
    %c0_14 = arith.constant 0 : index
    %c0_15 = arith.constant 0 : index
    %c0_16 = arith.constant 0 : index
    %19 = vector.load %arg7[%c0_14, %c0_15, %c0_16] : memref<1x8x128xf32, #tpu.memory_space<vmem>>, vector<1x8x128xf32>
    %20 = arith.addf %19, %15 : vector<1x8x128xf32>
    %c0_17 = arith.constant 0 : index
    %c0_18 = arith.constant 0 : index
    %c0_19 = arith.constant 0 : index
    %21 = vector.load %arg7[%c0_17, %c0_18, %c0_19] : memref<1x8x128xf32, #tpu.memory_space<vmem>>, vector<1x8x128xf32>
    tpu.vector_store %arg7[%c0_17, %c0_18, %c0_19], %20 {strides = array<i32>} : memref<1x8x128xf32, #tpu.memory_space<vmem>>, vector<1x8x128xf32>,
    %22 = arith.extui %0 : i1 to i32
    %c0_i32_20 = arith.constant 0 : i32
    %23 = arith.cmpi ne, %22, %c0_i32_20 : i32
    scf.if %23 {
      %c0_21 = arith.constant 0 : index
      %c0_22 = arith.constant 0 : index
      %c0_23 = arith.constant 0 : index
      %24 = vector.load %arg6[%c0_21, %c0_22, %c0_23] : memref<1x8x128xf32, #tpu.memory_space<vmem>>, vector<1x8x128xf32>
      %25 = vector.shape_cast %24 : vector<1x8x128xf32> to vector<1x1x8x128xf32>
      %cst_24 = arith.constant dense<0.000000e+00> : vector<1xf32>
      %26 = vector.multi_reduction <add>, %25, %cst_24 [1, 2, 3] : vector<1x1x8x128xf32> to vector<1xf32>
      %27 = vector.shape_cast %26 : vector<1xf32> to vector<1x1x1x1xf32>
      %28 = vector.extract %27[0, 0, 0, 0] : f32 from vector<1x1x1x1xf32>
      %c0_25 = arith.constant 0 : index
      %c0_26 = arith.constant 0 : index
      %c0_27 = arith.constant 0 : index
      %29 = vector.load %arg7[%c0_25, %c0_26, %c0_27] : memref<1x8x128xf32, #tpu.memory_space<vmem>>, vector<1x8x128xf32>
      %30 = vector.shape_cast %29 : vector<1x8x128xf32> to vector<1x1x8x128xf32>
      %cst_28 = arith.constant dense<0.000000e+00> : vector<1xf32>
      %31 = vector.multi_reduction <add>, %30, %cst_28 [1, 2, 3] : vector<1x1x8x128xf32> to vector<1xf32>
      %32 = vector.shape_cast %31 : vector<1xf32> to vector<1x1x1x1xf32>
      %33 = vector.extract %32[0, 0, 0, 0] : f32 from vector<1x1x1x1xf32>
      %34 = tpu.iota {dimensions = array<i32: 2>} : vector<1x1x128xi32>
      %c0_i32_29 = arith.constant 0 : i32
      %35 = vector.broadcast %c0_i32_29 : i32 to vector<1x1x128xi32>
      %36 = arith.cmpi eq, %34, %35 : vector<1x1x128xi32>
      %c1_i32 = arith.constant 1 : i32
      %37 = vector.broadcast %c1_i32 : i32 to vector<1x1x128xi32>
      %38 = arith.cmpi eq, %34, %37 : vector<1x1x128xi32>
      %cst_30 = arith.constant 0.000000e+00 : f32
      %39 = vector.broadcast %33 : f32 to vector<1x1x128xf32>
      %40 = vector.broadcast %cst_30 : f32 to vector<1x1x128xf32>
      %41 = arith.select %38, %39, %40 : vector<1x1x128xi1>, vector<1x1x128xf32>
      %42 = vector.broadcast %28 : f32 to vector<1x1x128xf32>
      %43 = arith.select %36, %42, %41 : vector<1x1x128xi1>, vector<1x1x128xf32>
      %c0_31 = arith.constant 0 : index
      %c0_32 = arith.constant 0 : index
      %c0_33 = arith.constant 0 : index
      %44 = vector.load %arg5[%c0_31, %c0_32, %c0_33] : memref<1x1x128xf32, #tpu.memory_space<vmem>>, vector<1x1x128xf32>
      tpu.vector_store %arg5[%c0_31, %c0_32, %c0_33], %43 {strides = array<i32>} : memref<1x1x128xf32, #tpu.memory_space<vmem>>, vector<1x1x128xf32>,
    } else {
    }
    return
  }
  func.func @transform_0(%arg0: i32, %arg1: i32, %arg2: i32) -> (i32, i32, i32) {
    %c1_i32 = arith.constant 1 : i32
    %0 = arith.muli %arg1, %c1_i32 : i32
    %1 = arith.addi %0, %arg2 : i32
    %c0_i32 = arith.constant 0 : i32
    %c0_i32_0 = arith.constant 0 : i32
    return %arg0, %c0_i32, %1 : i32, i32, i32
  }
  func.func @transform_1(%arg0: i32, %arg1: i32, %arg2: i32) -> (i32, i32, i32) {
    %c1_i32 = arith.constant 1 : i32
    %0 = arith.muli %arg1, %c1_i32 : i32
    %1 = arith.addi %0, %arg2 : i32
    %c0_i32 = arith.constant 0 : i32
    %c0_i32_0 = arith.constant 0 : i32
    return %arg0, %c0_i32, %1 : i32, i32, i32
  }
  func.func @transform_2(%arg0: i32, %arg1: i32, %arg2: i32) -> (i32, i32, i32) {
    %c1_i32 = arith.constant 1 : i32
    %0 = arith.muli %arg0, %c1_i32 : i32
    %1 = arith.addi %0, %arg1 : i32
    %c0_i32 = arith.constant 0 : i32
    %c0_i32_0 = arith.constant 0 : i32
    %c0_i32_1 = arith.constant 0 : i32
    return %1, %c0_i32, %c0_i32_0 : i32, i32, i32
  }
}

</mosaic_0001>

<llo_original>
// kernel: tpu_custom_call.1
$region0: #{tpu_custom_call.1}
  #allocation0 [shape = 'u32[]', space=smem, size = 0x4, offset = 0x4, fixed_abs, tag = 'smem constant byte address 0x4 - core index']
  #allocation1 [shape = 'u32[144,128]{1,0:T(1,128)}', space=vmem, size = 0x12000, scoped, tag = 'internal scratch']
  #allocation2 [shape = 'f32[1,8,128]{2,1,0:T(8,128)}', space=vmem, size = 0x1000, scoped, tag = 'scratch operand']
  #allocation3 [shape = 'f32[1,8,128]{2,1,0:T(8,128)}', space=vmem, size = 0x1000, scoped, tag = 'scratch operand']
  %s0 = inlined_call_operand.hbm [shape: f32[2,8,128], index: 0, kind: input, shape index: {}]
  %s1 = inlined_call_operand.hbm [shape: f32[2,8,128], index: 1, kind: input, shape index: {}]
  %s2 = inlined_call_operand.hbm [shape: f32[2,1,128], index: 2, kind: output, shape index: {}]
  %s3 = sld [smem:[#allocation0]]
  $region57: #{tpu_custom_call.1} parent=0
    _
  %s5 = ssub.s32 1, %s3
  %s6 = scalar_select 0, %s5, %s3
  $region1: #{tpu_custom_call.1} parent=0
    #allocation4 [shape = 'u8[8192]{0}', space=vmem, size = 0x2000, scoped, tag = 'input window, operand 0']
    #allocation5 [shape = 's32[2]{0}', space=sflag, size = 0x8, scoped, tag = 'scoped memory for tpu_custom_call.1']
    #allocation6 [shape = 's32[2]{0}', space=sflag, size = 0x8, scoped, tag = 'scoped memory for tpu_custom_call.1']
    #allocation7 [shape = 'u8[8192]{0}', space=vmem, size = 0x2000, scoped, tag = 'input window, operand 1']
    #allocation8 [shape = 's32[2]{0}', space=sflag, size = 0x8, scoped, tag = 'scoped memory for tpu_custom_call.1']
    #allocation9 [shape = 'u8[1024]{0}', space=vmem, size = 0x400, scoped, tag = 'output window, operand 0']
    %7 = vsyncpa [#allocation5], 0
    %s8 = scalar_lea.sflag [#allocation5], 1
    %9 = vsyncpa %s8, 0
    %10 = vsyncpa [#allocation8], 0
    %s11 = scalar_lea.sflag [#allocation8], 1
    %12 = vsyncpa %s11, 0
    %13 = vsyncpa [#allocation6], 0
    %s14 = scalar_lea.sflag [#allocation6], 1
    %15 = vsyncpa %s14, 0
    loop: start=0, step=1, limit=4
    $region2: #{tpu_custom_call.1} parent=1 // loop_pre_header
      _
    $region3: #{tpu_custom_call.1} parent=1 // loop_header
      %s17 = sphi 0, %s21
      %p18 = scmp.ge.s32.totalorder %s17, 4
      %s24 = sphi 0, %s43
      %s25 = sphi 0, %s39
      %s26 = sphi 0, %s35
      %s27 = sphi 0, %s24
      %s28 = sphi 0, %s25
      %s29 = sphi 0, %s26
      %s30 = sphi 0, %s27
      %s31 = sphi 0, %s28
      %s32 = sphi 0, %s29
      %s50 = sphi 0, %s52
      %s53 = sphi 0, %s50
      %s54 = sphi 0, %s53
      %s70 = sphi 0, %s54
      %s80 = sphi 0, %s82
      %s83 = sphi 0, %s80
      %s84 = sphi 0, %s83
      %s100 = sphi 0, %s84
      %s108 = sphi 0, %s110
      %s111 = sphi 0, %s108
      %s112 = sphi 0, %s111
      %s128 = sphi 0, %s112
    $region4: #{tpu_custom_call.1} parent=1 // loop_header_branch
      %20 = sbr.rel (%p18) target = $region8
    $region5: #{tpu_custom_call.1} parent=1 // loop_body
      %s22 = ssub.s32 %s17, 1
      %s23 = ssub.s32 %s17, 2
      %s33 = sadd.s32 1, %s26
      %p34 = scmp.ge.s32.totalorder %s33, 1
      %s35 = scalar_select %p34, 0, %s33
      %s36 = sadd.s32 1, %s25
      %s37 = scalar_select %p34, %s36, %s25
      %p38 = scmp.ge.s32.totalorder %s37, 1
      %s39 = scalar_select %p38, 0, %s37
      %s40 = sadd.s32 1, %s24
      %s41 = scalar_select %p38, %s40, %s24
      %p42 = scmp.ge.s32.totalorder %s41, 2
      %s43 = scalar_select %p42, 0, %s41
      %s44 = sadd.s32 %s25, %s26
      %s45 = sadd.s32 %s39, %s35
      %s46 = ssub.s32 %s24, %s43
      %s47 = ssub.s32 %s44, %s45
      %s48 = sor.u32 %s46, %s47
      %p49 = scmp.eq.s32.totalorder %s48, 0
      %s51 = sadd.s32 %s50, 1
      %s52 = scalar_select %p49, %s50, %s51
      %p55 = pneg %p49
      %p56 = scmp.eq.s32.totalorder %s17, 1
      %p57 = por %p55, %p56
      %p58 = scmp.ne.s32.totalorder %s50, %s53
      %p59 = scmp.eq.s32.totalorder %s17, 0
      %p60 = por %p58, %p59
      %p61 = scmp.ne.s32.totalorder %s50, %s53
      %p62 = scmp.eq.s32.totalorder %s22, 1
      %p63 = por %p61, %p62
      %p64 = scmp.ne.s32.totalorder %s53, %s54
      %p65 = scmp.eq.s32.totalorder %s22, 0
      %p66 = por %p64, %p65
      %p67 = scmp.ne.s32.totalorder %s53, %s54
      %p68 = scmp.eq.s32.totalorder %s23, 1
      %p69 = por %p67, %p68
      %p71 = scmp.ne.s32.totalorder %s54, %s70
      %p72 = scmp.eq.s32.totalorder %s23, 0
      %p73 = por %p71, %p72
      %s74 = sadd.s32 %s25, %s26
      %s75 = sadd.s32 %s39, %s35
      %s76 = ssub.s32 %s24, %s43
      %s77 = ssub.s32 %s74, %s75
      %s78 = sor.u32 %s76, %s77
      %p79 = scmp.eq.s32.totalorder %s78, 0
      %s81 = sadd.s32 %s80, 1
      %s82 = scalar_select %p79, %s80, %s81
      %p85 = pneg %p79
      %p86 = scmp.eq.s32.totalorder %s17, 1
      %p87 = por %p85, %p86
      %p88 = scmp.ne.s32.totalorder %s80, %s83
      %p89 = scmp.eq.s32.totalorder %s17, 0
      %p90 = por %p88, %p89
      %p91 = scmp.ne.s32.totalorder %s80, %s83
      %p92 = scmp.eq.s32.totalorder %s22, 1
      %p93 = por %p91, %p92
      %p94 = scmp.ne.s32.totalorder %s83, %s84
      %p95 = scmp.eq.s32.totalorder %s22, 0
      %p96 = por %p94, %p95
      %p97 = scmp.ne.s32.totalorder %s83, %s84
      %p98 = scmp.eq.s32.totalorder %s23, 1
      %p99 = por %p97, %p98
      %p101 = scmp.ne.s32.totalorder %s84, %s100
      %p102 = scmp.eq.s32.totalorder %s23, 0
      %p103 = por %p101, %p102
      %s104 = sadd.s32 %s24, %s25
      %s105 = sadd.s32 %s43, %s39
      %s106 = ssub.s32 %s104, %s105
      %p107 = scmp.eq.s32.totalorder %s106, 0
      %s109 = sadd.s32 %s108, 1
      %s110 = scalar_select %p107, %s108, %s109
      %p113 = pneg %p107
      %p114 = scmp.eq.s32.totalorder %s17, 1
      %p115 = por %p113, %p114
      %p116 = scmp.ne.s32.totalorder %s108, %s111
      %p117 = scmp.eq.s32.totalorder %s17, 0
      %p118 = por %p116, %p117
      %p119 = scmp.ne.s32.totalorder %s108, %s111
      %p120 = scmp.eq.s32.totalorder %s22, 1
      %p121 = por %p119, %p120
      %p122 = scmp.ne.s32.totalorder %s111, %s112
      %p123 = scmp.eq.s32.totalorder %s22, 0
      %p124 = por %p122, %p123
      %p125 = scmp.ne.s32.totalorder %s111, %s112
      %p126 = scmp.eq.s32.totalorder %s23, 1
      %p127 = por %p125, %p126
      %p129 = scmp.ne.s32.totalorder %s112, %s128
      %p130 = scmp.eq.s32.totalorder %s23, 0
      %p131 = por %p129, %p130
      %p132 = scmp.le.s32.totalorder 1, %s17
      %p133 = scmp.lt.s32.totalorder %s17, 3
      %p134 = pnand %p132, %p133
      %p135 = pneg %p134
      // Predicated region
      $region9: #{tpu_custom_call.1} parent=5 // pred_check
        _
      $region10: #{tpu_custom_call.1} parent=5 // pred_check_branch
        %137 = sbr.rel (%p134) target = $region12
      $region11: #{tpu_custom_call.1} parent=5 // pred_region
        %s138 = ssub.s32 %s17, 1
      $region12: #{tpu_custom_call.1} parent=5 // pred_fallthru
        _
      %p139 = scmp.lt.s32.totalorder %s17, 2
      // Predicated region
      $region13: #{tpu_custom_call.1} parent=5 // pred_check
        %p140 = pneg %p139
      $region14: #{tpu_custom_call.1} parent=5 // pred_check_branch
        %142 = sbr.rel (%p140) target = $region16
      $region15: #{tpu_custom_call.1} parent=5 // pred_region
        // Predicated region
        $region17: #{tpu_custom_call.1} parent=15 // pred_check
          %p143 = pneg %p60
        $region18: #{tpu_custom_call.1} parent=15 // pred_check_branch
          %145 = sbr.rel (%p143) target = $region20
        $region19: #{tpu_custom_call.1} parent=15 // pred_region
          %s146 = sand.u32 %s50, 1
          %s147 = scalar_lea.sflag [#allocation5], %s146
          %s148 = sand.u32 %s50, 1
          %s149 = smul.addr %s148, 8
          %s150 = scalar_lea.vmem [#allocation4], %s149
          %s151 = sadd.s32 %s25, %s26
          %s153 = ssub.s32 128, 128
          %154 = vsyncadd %s147, %s153
          %s155 = sadd.s32 %s151, %s24
          %s156 = smul.addr %s155, 128
          %s157 = scalar_lea.hbm %s0, %s156
          %s159 = sshll.u32 %s150, 4
          %s160 = int_to_ptr.vmem [resolvable:$true] %s159
          %162 = dma.hbm_to_vmem [thread:$0]  %s157, 128, %s160, %s147
        $region20: #{tpu_custom_call.1} parent=15 // pred_fallthru
          _
        // Predicated region
        $region21: #{tpu_custom_call.1} parent=15 // pred_check
          %p163 = pneg %p90
        $region22: #{tpu_custom_call.1} parent=15 // pred_check_branch
          %165 = sbr.rel (%p163) target = $region24
        $region23: #{tpu_custom_call.1} parent=15 // pred_region
          %s166 = sand.u32 %s80, 1
          %s167 = scalar_lea.sflag [#allocation8], %s166
          %s168 = sand.u32 %s80, 1
          %s169 = smul.addr %s168, 8
          %s170 = scalar_lea.vmem [#allocation7], %s169
          %s171 = sadd.s32 %s25, %s26
          %s173 = ssub.s32 128, 128
          %174 = vsyncadd %s167, %s173
          %s175 = sadd.s32 %s171, %s24
          %s176 = smul.addr %s175, 128
          %s177 = scalar_lea.hbm %s1, %s176
          %s179 = sshll.u32 %s170, 4
          %s180 = int_to_ptr.vmem [resolvable:$true] %s179
          %182 = dma.hbm_to_vmem [thread:$0]  %s177, 128, %s180, %s167
        $region24: #{tpu_custom_call.1} parent=15 // pred_fallthru
          _
      $region16: #{tpu_custom_call.1} parent=5 // pred_fallthru
        _
      %p183 = scmp.le.s32.totalorder 1, %s17
      %p184 = scmp.lt.s32.totalorder %s17, 3
      %p185 = pnand %p183, %p184
      %p186 = pneg %p185
      // Predicated region
      $region25: #{tpu_custom_call.1} parent=5 // pred_check
        _
      $region26: #{tpu_custom_call.1} parent=5 // pred_check_branch
        %188 = sbr.rel (%p185) target = $region28
      $region27: #{tpu_custom_call.1} parent=5 // pred_region
        %s189 = ssub.s32 %s17, 1
        %s190 = sand.u32 %s53, 1
        %s191 = scalar_lea.sflag [#allocation5], %s190
        %s192 = sand.u32 %s53, 1
        %s193 = smul.addr %s192, 8
        %s194 = scalar_lea.vmem [#allocation4], %s193
        // Predicated region
        $region29: #{tpu_custom_call.1} parent=27 // pred_check
          %p195 = pneg %p66
        $region30: #{tpu_custom_call.1} parent=27 // pred_check_branch
          %197 = sbr.rel (%p195) target = $region32
        $region31: #{tpu_custom_call.1} parent=27 // pred_region
          %198 = dma.done %s191, 128
        $region32: #{tpu_custom_call.1} parent=27 // pred_fallthru
          _
        %s199 = sand.u32 %s83, 1
        %s200 = scalar_lea.sflag [#allocation8], %s199
        %s201 = sand.u32 %s83, 1
        %s202 = smul.addr %s201, 8
        %s203 = scalar_lea.vmem [#allocation7], %s202
        // Predicated region
        $region33: #{tpu_custom_call.1} parent=27 // pred_check
          %p204 = pneg %p96
        $region34: #{tpu_custom_call.1} parent=27 // pred_check_branch
          %206 = sbr.rel (%p204) target = $region36
        $region35: #{tpu_custom_call.1} parent=27 // pred_region
          %207 = dma.done %s200, 128
        $region36: #{tpu_custom_call.1} parent=27 // pred_fallthru
          _
        %s208 = sand.u32 %s53, 1
        %s209 = scalar_lea.sflag [#allocation5], %s208
        %s210 = sand.u32 %s53, 1
        %s211 = smul.addr %s210, 8
        %s212 = scalar_lea.vmem [#allocation4], %s211
        %p213 = pneg %p66
        %p214 = pneg %p63
        %s215 = sand.u32 %s83, 1
        %s216 = scalar_lea.sflag [#allocation8], %s215
        %s217 = sand.u32 %s83, 1
        %s218 = smul.addr %s217, 8
        %s219 = scalar_lea.vmem [#allocation7], %s218
        %p220 = pneg %p96
        %p221 = pneg %p93
        %p222 = pneg %p124
        %p223 = pneg %p121
        %s224 = sand.u32 %s111, 1
        %s225 = scalar_lea.sflag [#allocation6], %s224
        %s226 = sand.u32 %s111, 1
        %s227 = scalar_lea.vmem [#allocation9], %s226
        %s228 = sadd.s32 %s28, %s29
        %s229 = sadd.s32 %s28, %s29
        %s230 = sadd.s32 %s27, %s28
        %p231 = scmp.eq.s32.totalorder %s29, 0
        // Predicated region
        $region37: #{tpu_custom_call.1} parent=27 // pred_check
          %p232 = pneg %p231
        $region38: #{tpu_custom_call.1} parent=27 // pred_check_branch
          %234 = sbr.rel (%p232) target = $region40
        $region39: #{tpu_custom_call.1} parent=27 // pred_region
          %235 = vst [vmem:[#allocation2] sm:$0xff] 0.0
          %236 = vst [vmem:[#allocation3] sm:$0xff] 0.0
        $region40: #{tpu_custom_call.1} parent=27 // pred_fallthru
          _
        %v237 = vld [vmem:[%s194] sm:$0xff]
        %v238 = vld [vmem:[%s203] sm:$0xff]
        %v239 = vxor.u32 %v237, 2147483648
        %v240 = vmul.f32 %v239, 1.442695
        %v241 = vpow.pop %v240
        %v242 = vadd.f32 %v241, 1.0
        %v243 = vrcp.pop %v242
        %v244 = vmul.f32 1.0, %v243
        %v245 = vmul.f32 %v244, %v238
        %v246 = vadd.f32 %v245, 0.0
        %v247 = vadd.f32 %v244, %v238
        %v248 = vadd.f32 %v247, 0.0
        %v249 = vld [vmem:[#allocation2] sm:$0xff]
        %v250 = vadd.f32 %v249, %v246
        %251 = vst [vmem:[#allocation2] sm:$0xff] %v250
        %v252 = vld [vmem:[#allocation3] sm:$0xff]
        %v253 = vadd.f32 %v252, %v248
        %254 = vst [vmem:[#allocation3] sm:$0xff] %v253
        // Predicated region
        $region41: #{tpu_custom_call.1} parent=27 // pred_check
          %p255 = pneg %p231
        $region42: #{tpu_custom_call.1} parent=27 // pred_check_branch
          %257 = sbr.rel (%p255) target = $region44
        $region43: #{tpu_custom_call.1} parent=27 // pred_region
          %v258 = vld [vmem:[#allocation2] sm:$0xff]
          %259 = vadd.xlane.f32.xlu0 %v258
          %v260 = vpop.xlane.xlu0 %259
          %v261 = vrot.slane %v260, 4
          %v262 = vadd.f32 %v260, %v261
          %v263 = vrot.slane %v262, 2
          %v264 = vadd.f32 %v262, %v263
          %v265 = vrot.slane %v264, 1
          %v266 = vadd.f32 %v264, %v265
          %s267 = vtos %v266
          %v268 = vld [vmem:[#allocation3] sm:$0xff]
          %269 = vadd.xlane.f32.xlu0 %v268
          %v270 = vpop.xlane.xlu0 %269
          %v271 = vrot.slane %v270, 4
          %v272 = vadd.f32 %v270, %v271
          %v273 = vrot.slane %v272, 2
          %v274 = vadd.f32 %v272, %v273
          %v275 = vrot.slane %v274, 1
          %v276 = vadd.f32 %v274, %v275
          %s277 = vtos %v276
          %v278 = vlaneseq
          %v279 = vand.u32 %v278, 127
          %vm280 = vcmp.eq.s32.totalorder %v279, 0
          %vm281 = vcmp.eq.s32.totalorder %v279, 1
          %v282 = vstv %s277
          %v283 = vsel %vm281, %v282, 0.0
          %v284 = vstv %s267
          %v285 = vsel %vm280, %v284, %v283
          %286 = vst [vmem:[%s227] sm:$0x1] %v285
        $region44: #{tpu_custom_call.1} parent=27 // pred_fallthru
          _
        %s287 = sand.u32 %s111, 1
        %s288 = scalar_lea.sflag [#allocation6], %s287
        %s289 = sand.u32 %s111, 1
        %s290 = scalar_lea.vmem [#allocation9], %s289
        // Predicated region
        $region45: #{tpu_custom_call.1} parent=27 // pred_check
          %p291 = pneg %p121
        $region46: #{tpu_custom_call.1} parent=27 // pred_check_branch
          %293 = sbr.rel (%p291) target = $region48
        $region47: #{tpu_custom_call.1} parent=27 // pred_region
          %s294 = sadd.s32 %s27, %s28
          %s296 = ssub.s32 16, 16
          %297 = vsyncadd %s288, %s296
          %s298 = smul.addr %s294, 16
          %s299 = scalar_lea.hbm %s2, %s298
          %s301 = sshll.u32 %s290, 4
          %s302 = int_to_ptr.vmem [resolvable:$true] %s301
          %304 = dma.vmem_to_hbm [thread:$0]  %s302, 16, %s299, %s288
        $region48: #{tpu_custom_call.1} parent=27 // pred_fallthru
          _
      $region28: #{tpu_custom_call.1} parent=5 // pred_fallthru
        _
      %p305 = scmp.le.s32.totalorder 2, %s17
      // Predicated region
      $region49: #{tpu_custom_call.1} parent=5 // pred_check
        %p306 = pneg %p305
      $region50: #{tpu_custom_call.1} parent=5 // pred_check_branch
        %308 = sbr.rel (%p306) target = $region52
      $region51: #{tpu_custom_call.1} parent=5 // pred_region
        %s309 = ssub.s32 %s17, 2
        // Predicated region
        $region53: #{tpu_custom_call.1} parent=51 // pred_check
          %p310 = pneg %p127
        $region54: #{tpu_custom_call.1} parent=51 // pred_check_branch
          %312 = sbr.rel (%p310) target = $region56
        $region55: #{tpu_custom_call.1} parent=51 // pred_region
          %s313 = sand.u32 %s112, 1
          %s314 = scalar_lea.sflag [#allocation6], %s313
          %s315 = sand.u32 %s112, 1
          %s316 = scalar_lea.vmem [#allocation9], %s315
          %317 = dma.done %s314, 16
        $region56: #{tpu_custom_call.1} parent=51 // pred_fallthru
          _
      $region52: #{tpu_custom_call.1} parent=5 // pred_fallthru
        _
    $region6: #{tpu_custom_call.1} parent=1 // loop_footer
      %s21 = sadd.s32 1, %s17
    $region7: #{tpu_custom_call.1} parent=1 // loop_footer_branch
      %16 = sbr.rel target = $region3
    $region8: #{tpu_custom_call.1} parent=1 // loop_exit
      _
    %318 = vsyncpa [#allocation5], 1
    %s319 = scalar_lea.sflag [#allocation5], 1
    %320 = vsyncpa %s319, 1
    %321 = vsyncpa [#allocation8], 1
    %s322 = scalar_lea.sflag [#allocation8], 1
    %323 = vsyncpa %s322, 1
    %324 = vsyncpa [#allocation6], 1
    %s325 = scalar_lea.sflag [#allocation6], 1
    %326 = vsyncpa %s325, 1

</llo_original>
